<compile_context>
chip_gen: v5e
topology: v5e:2x2
jax: 0.10.0
libtpu: 0.0.40
codegen_flags: <defaults>
</compile_context>

<pallas_src>
import jax
import jax.numpy as jnp
from jax.experimental import pallas as pl
from jax.experimental.pallas import tpu as pltpu


def _copy_kernel(x_ref, o_ref):
    # Pure VMEM tile copy; no extra VPU work (v5e has a single vector-store slot).
    o_ref[...] = x_ref[...]


def _choose_lane_dense_2d(shape, size):
    """Flatten `size` elements into (lead, lane) with lane a large multiple of 128."""
    for lane in (2048, 1024, 512, 256, 128):
        if size % lane == 0:
            return size // lane, lane
    # Fallback: keep the natural trailing dim (correct, possibly masked stores).
    lane = shape[-1]
    return size // lane, lane


def _choose_row_tile(lead, lane, itemsize, target_bytes=2 * 1024 * 1024):
    """Pick a row-tile (sublane) count giving ~target_bytes per VMEM buffer."""
    sublane_mult = max(8, 32 // itemsize)   # 8 (f32) / 16 (bf16) / 32 (int8)
    max_rows = max(sublane_mult, target_bytes // (lane * itemsize))
    if lead <= max_rows:
        return lead                          # whole row extent in one block
    # Largest aligned divisor of `lead` that fits the VMEM budget.
    t = (max_rows // sublane_mult) * sublane_mult
    while t >= sublane_mult:
        if lead % t == 0:
            return t
        t -= sublane_mult
    # No aligned divisor: use an aligned tile and let Pallas handle the
    # ragged final block (out-of-bounds rows are not written back).
    return (max_rows // sublane_mult) * sublane_mult


def _pallas_identity_copy(x: jnp.ndarray) -> jnp.ndarray:
    """Materialize a fresh copy of `x` with a tiled, pipelined Pallas kernel."""
    if x.ndim == 0 or x.size == 0:
        # Degenerate shapes: nothing to tile; identity is identity.
        return x

    orig_shape = x.shape
    dtype = x.dtype
    size = int(x.size)
    itemsize = jnp.dtype(dtype).itemsize

    lead, lane = _choose_lane_dense_2d(orig_shape, size)
    tm = _choose_row_tile(lead, lane, itemsize)
    num_tiles = pl.cdiv(lead, tm)

    x2d = x.reshape(lead, lane)

    out2d = pl.pallas_call(
        _copy_kernel,
        out_shape=jax.ShapeDtypeStruct((lead, lane), dtype),
        grid=(num_tiles,),
        in_specs=[pl.BlockSpec((tm, lane), lambda i: (i, 0))],
        out_specs=pl.BlockSpec((tm, lane), lambda i: (i, 0)),
        compiler_params=pltpu.CompilerParams(
            # Row tiles are independent -> shard across TensorCores on v7x.
            dimension_semantics=("parallel",),
        ),
    )(x2d)

    return out2d.reshape(orig_shape)


def none_reducer(x: jnp.ndarray, *, materialize: bool = False) -> jnp.ndarray:
    """Pallas implementation of NoneReducer.forward(x) -> x.

    Default path returns `x` unchanged (zero-copy, matching the PyTorch module,
    which returns the same tensor). Pass materialize=True to force a physical
    copy through the tiled Pallas kernel.
    """
    if not materialize:
        return x
    return _pallas_identity_copy(x)


if __name__ == "__main__":
    key = jax.random.PRNGKey(0)

    # Small NCHW-style input consistent with a generic reducer module.
    x = jax.random.normal(key, (2, 4, 16, 16), dtype=jnp.float32)

    # Zero-copy default path (faithful to `return x`).
    y0 = none_reducer(x)
    assert y0 is x

    # Pallas copy path (exercises the kernel).
    y = jax.block_until_ready(none_reducer(x, materialize=True))
    assert y.shape == x.shape and y.dtype == x.dtype
    assert bool(jnp.all(y == x))

    # Larger input to exercise the multi-tile, lane-dense path:
    # 32*8*64*64 f32 = 4 MiB -> (512, 2048), tiled as 2 x (256, 2048) blocks.
    x_big = jax.random.normal(jax.random.PRNGKey(1), (32, 8, 64, 64), dtype=jnp.float32)
    y_big = jax.block_until_ready(none_reducer(x_big, materialize=True))
    assert y_big.shape == x_big.shape and y_big.dtype == x_big.dtype
    assert bool(jnp.all(y_big == x_big))

    print("KERNEL_OK")
</pallas_src>

<mosaic_0001>
module attributes {stable_mosaic.version = 11 : i64} {
  func.func @_copy_kernel(%arg0: i32, %arg1: memref<1x2048xf32, #tpu.memory_space<vmem>>, %arg2: memref<1x2048xf32, #tpu.memory_space<vmem>>) attributes {dimension_semantics = [#tpu.dimension_semantics<parallel>], iteration_bounds = array<i64: 1>, scalar_prefetch = 0 : i64, scratch_operands = 0 : i64, tpu.core_type = #tpu.core_type<tc>, window_params = [{transform_indices = @transform_0, window_bounds = array<i64: 1, 2048>}, {transform_indices = @transform_1, window_bounds = array<i64: 1, 2048>}]} {
    %c0 = arith.constant 0 : index
    %c0_0 = arith.constant 0 : index
    %0 = vector.load %arg1[%c0, %c0_0] : memref<1x2048xf32, #tpu.memory_space<vmem>>, vector<1x2048xf32>
    %c0_1 = arith.constant 0 : index
    %c0_2 = arith.constant 0 : index
    %1 = vector.load %arg2[%c0_1, %c0_2] : memref<1x2048xf32, #tpu.memory_space<vmem>>, vector<1x2048xf32>
    tpu.vector_store %arg2[%c0_1, %c0_2], %0 {strides = array<i32>} : memref<1x2048xf32, #tpu.memory_space<vmem>>, vector<1x2048xf32>,
    return
  }
  func.func @transform_0(%arg0: i32) -> (i32, i32) {
    %c0_i32 = arith.constant 0 : i32
    %c0_i32_0 = arith.constant 0 : i32
    return %arg0, %c0_i32 : i32, i32
  }
  func.func @transform_1(%arg0: i32) -> (i32, i32) {
    %c0_i32 = arith.constant 0 : i32
    %c0_i32_0 = arith.constant 0 : i32
    return %arg0, %c0_i32 : i32, i32
  }
}

</mosaic_0001>

<llo_original>
// kernel: tpu_custom_call.1
$region0: #{tpu_custom_call.1}
  #allocation0 [shape = 'u32[]', space=smem, size = 0x4, offset = 0x4, fixed_abs, tag = 'smem constant byte address 0x4 - core index']
  #allocation1 [shape = 'u32[72,128]{1,0:T(1,128)}', space=vmem, size = 0x9000, scoped, tag = 'internal scratch']
  %s0 = inlined_call_operand.hbm [shape: f32[1,2048], index: 0, kind: input, shape index: {}]
  %s1 = inlined_call_operand.hbm [shape: f32[1,2048], index: 1, kind: output, shape index: {}]
  %s2 = sld [smem:[#allocation0]]
  $region18: #{tpu_custom_call.1} parent=0
    _
  %s4 = ssub.s32 1, %s2
  %s5 = scalar_select 0, %s4, %s2
  $region1: #{tpu_custom_call.1} parent=0
    #allocation2 [shape = 'u8[8192]{0}', space=vmem, size = 0x2000, scoped, tag = 'input window, operand 0, single buffered']
    #allocation3 [shape = 's32[1]{0}', space=sflag, size = 0x4, scoped, tag = 'scoped memory for tpu_custom_call.1']
    #allocation4 [shape = 's32[1]{0}', space=sflag, size = 0x4, scoped, tag = 'scoped memory for tpu_custom_call.1']
    #allocation5 [shape = 'u8[8192]{0}', space=vmem, size = 0x2000, scoped, tag = 'output window, operand 0, single buffered']
    %6 = vsyncpa [#allocation3], 0
    %7 = vsyncpa [#allocation4], 0
    // Predicated region
    $region2: #{tpu_custom_call.1} parent=1 // pred_check
      _
    $region3: #{tpu_custom_call.1} parent=1 // pred_check_branch
      %9 = sbr.rel (0) target = $region5
    $region4: #{tpu_custom_call.1} parent=1 // pred_region
      %11 = vsyncadd [#allocation3], 0
      %s13 = sshll.u32 %s0, 4
      %s14 = int_to_ptr.hbm [resolvable:$true] %s13
      %s15 = sshll.u32 [#allocation2], 4
      %s16 = int_to_ptr.vmem [resolvable:$true] %s15
      %18 = dma.hbm_to_vmem [thread:$0]  %s14, 256, %s16, [#allocation3]
    $region5: #{tpu_custom_call.1} parent=1 // pred_fallthru
      _
    // Predicated region
    $region6: #{tpu_custom_call.1} parent=1 // pred_check
      _
    $region7: #{tpu_custom_call.1} parent=1 // pred_check_branch
      %20 = sbr.rel (0) target = $region9
    $region8: #{tpu_custom_call.1} parent=1 // pred_region
      %22 = dma.done [#allocation3], 256
    $region9: #{tpu_custom_call.1} parent=1 // pred_fallthru
      _
    %v23 = vld [vmem:[#allocation2] sm:$0xff]
    %v24 = vld [vmem:[#allocation2 + $0x8] sm:$0xff]
    %25 = vst [vmem:[#allocation5] sm:$0xff] %v23
    %26 = vst [vmem:[#allocation5 + $0x8] sm:$0xff] %v24
    // Predicated region
    $region10: #{tpu_custom_call.1} parent=1 // pred_check
      _
    $region11: #{tpu_custom_call.1} parent=1 // pred_check_branch
      %28 = sbr.rel (0) target = $region13
    $region12: #{tpu_custom_call.1} parent=1 // pred_region
      %30 = vsyncadd [#allocation4], 0
      %s32 = sshll.u32 [#allocation5], 4
      %s33 = int_to_ptr.vmem [resolvable:$true] %s32
      %s34 = sshll.u32 %s1, 4
      %s35 = int_to_ptr.hbm [resolvable:$true] %s34
      %37 = dma.vmem_to_hbm [thread:$0]  %s33, 256, %s35, [#allocation4]
    $region13: #{tpu_custom_call.1} parent=1 // pred_fallthru
      _
    // Predicated region
    $region14: #{tpu_custom_call.1} parent=1 // pred_check
      _
    $region15: #{tpu_custom_call.1} parent=1 // pred_check_branch
      %39 = sbr.rel (0) target = $region17
    $region16: #{tpu_custom_call.1} parent=1 // pred_region
      %41 = dma.done [#allocation4], 256
    $region17: #{tpu_custom_call.1} parent=1 // pred_fallthru
      _
    %42 = vsyncpa [#allocation3], 1
    %43 = vsyncpa [#allocation4], 1

</llo_original>
